<compile_context>
chip_gen: v7x
topology: tpu7x:2x2x1
jax: 0.10.0
libtpu: 0.0.40
codegen_flags: <defaults>
</compile_context>

<pallas_src>
import functools

import jax
import jax.numpy as jnp
from jax import lax
from jax.experimental import pallas as pl
from jax.experimental.pallas import tpu as pltpu


_LANE = 128
_SUBLANE = 16          # covers f32 (8) and bf16 (16) sublane packing
_N_CORE_SPLIT = 2      # v7x has 2 TensorCores; harmless (sequential) on v5e/v6e


def _round_up(x, m):
    return ((x + m - 1) // m) * m


def _vmem_budget():
    """~3/4 of physical per-core VMEM (96 MiB on v5e/v6e, 48 MiB on v7x)."""
    try:
        phys = pltpu.get_tpu_info().vmem_capacity_bytes
    except Exception:
        phys = 64 * 1024 * 1024
    return max(16 * 1024 * 1024, (phys * 3) // 4)


def _choose_tile_m(M, Kp, Cp, gemm_isz, y_isz, out_isz, budget):
    """Largest M tile whose per-pass (not summed) footprint fits the budget."""
    def pass1(t):
        return (2 * t * Kp * gemm_isz          # patch tiles (double-buffered)
                + 2 * Kp * Cp * gemm_isz       # resident weights (2 bufs)
                + 2 * t * Cp * y_isz           # y writeback tiles
                + 3 * 16 * Cp * 4)             # stats output + scratch

    def pass2(t):
        return 2 * t * Cp * y_isz + 2 * t * Cp * out_isz + 4 * Cp * 4

    def fused(t):
        return (2 * t * Kp * gemm_isz + 2 * Kp * Cp * gemm_isz
                + 2 * t * Cp * out_isz + 4 * Cp * 4)

    tile = 2048
    while tile > _SUBLANE and max(pass1(tile), pass2(tile), fused(tile)) > budget:
        tile //= 2
    tile = min(tile, _round_up(max(M, 1), _SUBLANE))
    return max(_SUBLANE, (tile // _SUBLANE) * _SUBLANE)


def _pick_chunk(tile_m, cp):
    """Row-chunk for the in-kernel GEMM: divides tile_m, sublane aligned,
    and keeps a (chunk, Cp) f32 chunk within ~32 vregs."""
    cap = max(16, (128 * 1024) // (cp * 4))
    for c in (256, 128, 64, 32, 16):
        if c <= cap and tile_m % c == 0:
            return c
    return 16


# ----------------------------------------------------------------------------
# Pass 1: chunked matmul -> bf16 y tile + per-sublane partial BN statistics.
# Grid: (n_split [parallel], n_half [arbitrary]).  Each core accumulates its
# own partial sums in VMEM scratch and flushes them on its last grid step.
# ----------------------------------------------------------------------------
def _matmul_stats_kernel(p_ref, w_ref, y_ref, s_ref, acc_ref, *, chunk):
    i = pl.program_id(1)

    @pl.when(i == 0)
    def _init():
        acc_ref[...] = jnp.zeros_like(acc_ref)

    tile_m = y_ref.shape[0]
    n_chunks = tile_m // chunk

    def body(c, carry):
        r0 = pl.multiple_of(c * chunk, chunk)
        yc = jnp.dot(p_ref[pl.ds(r0, chunk), :], w_ref[...],
                     preferred_element_type=jnp.float32)        # (chunk, Cp) f32
        y_ref[pl.ds(r0, chunk), :] = yc.astype(y_ref.dtype)
        # Per-sublane partial reduce: no cross-sublane XLU work per step.
        yg = yc.reshape(chunk // 8, 8, yc.shape[-1])
        acc_ref[0:8, :] += jnp.sum(yg, axis=0)
        acc_ref[8:16, :] += jnp.sum(yg * yg, axis=0)
        return carry

    lax.fori_loop(0, n_chunks, body, 0, unroll=True)

    @pl.when(i == pl.num_programs(1) - 1)
    def _flush():
        s_ref[0, :, :] = acc_ref[...]


# ----------------------------------------------------------------------------
# Pass 2: y * scale + shift (+ activation), one M tile per grid step.
# ----------------------------------------------------------------------------
def _norm_act_kernel(y_ref, s_ref, o_ref, *, act):
    y = y_ref[...].astype(jnp.float32)
    yn = y * s_ref[0:1, :] + s_ref[1:2, :]
    if act == "relu":
        yn = jnp.maximum(yn, 0.0)
    elif act is not None:
        raise NotImplementedError(f"activation {act!r} not implemented")
    o_ref[...] = yn.astype(o_ref.dtype)


# ----------------------------------------------------------------------------
# Inference path: single fused matmul + affine + activation pass.
# ----------------------------------------------------------------------------
def _fused_affine_kernel(p_ref, w_ref, s_ref, o_ref, *, act, chunk):
    tile_m = o_ref.shape[0]
    n_chunks = tile_m // chunk

    def body(c, carry):
        r0 = pl.multiple_of(c * chunk, chunk)
        yc = jnp.dot(p_ref[pl.ds(r0, chunk), :], w_ref[...],
                     preferred_element_type=jnp.float32)
        yc = yc * s_ref[0:1, :] + s_ref[1:2, :]
        if act == "relu":
            yc = jnp.maximum(yc, 0.0)
        elif act is not None:
            raise NotImplementedError(f"activation {act!r} not implemented")
        o_ref[pl.ds(r0, chunk), :] = yc.astype(o_ref.dtype)
        return carry

    lax.fori_loop(0, n_chunks, body, 0, unroll=True)


# ----------------------------------------------------------------------------
# Plain-JAX glue: im2col, padding, pallas_calls, reshape back to NCHW.
# ----------------------------------------------------------------------------
def _im2col(x_nchw, k, stride, pad, dilation):
    N, C, H, W = x_nchw.shape
    xp = jnp.pad(x_nchw, ((0, 0), (0, 0), (pad, pad), (pad, pad)))
    Ho = (H + 2 * pad - dilation * (k - 1) - 1) // stride + 1
    Wo = (W + 2 * pad - dilation * (k - 1) - 1) // stride + 1
    cols = []
    for i in range(k):
        for j in range(k):
            hs = i * dilation
            ws = j * dilation
            patch = xp[:, :, hs:hs + stride * (Ho - 1) + 1:stride,
                             ws:ws + stride * (Wo - 1) + 1:stride]  # (N,C,Ho,Wo)
            cols.append(patch)
    # (N, C, k*k, Ho, Wo) -> (M, C*k*k): channel-major / kernel-minor, matching
    # PyTorch's weight.reshape(Cout, Cin*k*k) layout.
    patches = jnp.stack(cols, axis=2)
    patches = patches.transpose(0, 3, 4, 1, 2).reshape(N * Ho * Wo, C * k * k)
    return patches, Ho, Wo


def conv_bn_act(x, weight, gamma, beta, *, kernel_size, stride=1, dilation=1,
                groups=1, act=None, eps=1e-5, tile_m=None,
                mxu_dtype=jnp.bfloat16, running_mean=None, running_var=None):
    """x: (N, Cin, H, W), weight: (Cout, Cin, k, k).  Returns NCHW output.

    mxu_dtype: GEMM operand dtype (default bf16; pass None or jnp.float32 for
    full-precision operands).  Accumulation / BN statistics are always f32.
    If running_mean/running_var are given, the (eval-mode) BN is folded into a
    single fused pass; otherwise batch statistics are used (training mode),
    exactly like a fresh nn.BatchNorm2d forward.
    """
    if groups != 1:
        # TODO(synk): grouped convolution not implemented.
        raise NotImplementedError("groups > 1 is not implemented")

    N, Cin, H, W = x.shape
    Cout = weight.shape[0]
    k = kernel_size
    # Padding rule copied verbatim from the PyTorch module spec.
    pad = (k - 1) // 2 if dilation == 1 else dilation

    in_dtype = jnp.dtype(x.dtype if mxu_dtype is None else mxu_dtype)
    out_dtype = x.dtype

    # Cast BEFORE im2col so the large (M, K) intermediate is half-width.
    patches, Ho, Wo = _im2col(x.astype(in_dtype), k, stride, pad, dilation)
    M, K = patches.shape
    Kp = _round_up(K, _LANE)
    Cp = _round_up(Cout, _LANE)

    budget = _vmem_budget()
    gemm_isz = in_dtype.itemsize
    y_isz = gemm_isz                       # y intermediate stored in GEMM dtype
    out_isz = jnp.dtype(out_dtype).itemsize

    if tile_m is None:
        tile_m = _choose_tile_m(M, Kp, Cp, gemm_isz, y_isz, out_isz, budget)
    tile_m = max(_SUBLANE, _round_up(tile_m, _SUBLANE))
    chunk = _pick_chunk(tile_m, Cp)
    n_tiles = -(-M // tile_m)

    w2d = jnp.pad(weight.reshape(Cout, Cin * k * k).T,
                  ((0, Kp - K), (0, Cp - Cout))).astype(in_dtype)   # (Kp, Cp)
    g = jnp.pad(gamma.astype(jnp.float32), (0, Cp - Cout))
    b = jnp.pad(beta.astype(jnp.float32), (0, Cp - Cout))

    inference = (running_mean is not None) and (running_var is not None)

    if inference:
        # ---- Eval mode: fold BN into a single fused matmul+affine+act pass.
        rm = jnp.pad(running_mean.astype(jnp.float32), (0, Cp - Cout))
        rv = jnp.pad(running_var.astype(jnp.float32), (0, Cp - Cout))
        scale = g * lax.rsqrt(rv + eps)
        shift = b - rm * scale
        sc = jnp.stack([scale, shift])                              # (2, Cp)

        Mp = n_tiles * tile_m
        patches_p = jnp.pad(patches, ((0, Mp - M), (0, Kp - K)))

        out_flat = pl.pallas_call(
            functools.partial(_fused_affine_kernel, act=act, chunk=chunk),
            out_shape=jax.ShapeDtypeStruct((Mp, Cp), out_dtype),
            grid_spec=pltpu.PrefetchScalarGridSpec(
                num_scalar_prefetch=0,
                grid=(n_tiles,),
                in_specs=[
                    pl.BlockSpec((tile_m, Kp), lambda i: (i, 0)),
                    pl.BlockSpec((Kp, Cp), lambda i: (0, 0)),       # resident
                    pl.BlockSpec((2, Cp), lambda i: (0, 0)),        # resident
                ],
                out_specs=pl.BlockSpec((tile_m, Cp), lambda i: (i, 0)),
            ),
            compiler_params=pltpu.CompilerParams(
                dimension_semantics=("parallel",),
                vmem_limit_bytes=budget),
        )(patches_p, w2d, sc)
    else:
        # ---- Training mode: two passes with per-core partial statistics.
        n_split = _N_CORE_SPLIT if n_tiles >= 2 else 1
        n_half = -(-n_tiles // n_split)
        Mp = n_split * n_half * tile_m
        # Padded rows are exactly zero -> contribute zero to sum/sumsq (conv
        # has no bias before BN), so dividing by the true M is correct.
        patches_p = jnp.pad(patches, ((0, Mp - M), (0, Kp - K)))

        y, stats = pl.pallas_call(
            functools.partial(_matmul_stats_kernel, chunk=chunk),
            out_shape=(jax.ShapeDtypeStruct((Mp, Cp), in_dtype),
                       jax.ShapeDtypeStruct((n_split, 16, Cp), jnp.float32)),
            grid_spec=pltpu.PrefetchScalarGridSpec(
                num_scalar_prefetch=0,
                grid=(n_split, n_half),
                in_specs=[
                    pl.BlockSpec((tile_m, Kp), lambda c, i: (c * n_half + i, 0)),
                    pl.BlockSpec((Kp, Cp), lambda c, i: (0, 0)),    # resident
                ],
                out_specs=(
                    pl.BlockSpec((tile_m, Cp), lambda c, i: (c * n_half + i, 0)),
                    pl.BlockSpec((1, 16, Cp), lambda c, i: (c, 0, 0)),
                ),
                scratch_shapes=[pltpu.VMEM((16, Cp), jnp.float32)],
            ),
            compiler_params=pltpu.CompilerParams(
                dimension_semantics=("parallel", "arbitrary"),
                vmem_limit_bytes=budget),
        )(patches_p, w2d)

        # Combine per-core / per-sublane partials (tiny O(Cp) wrapper op).
        # NOTE: E[y^2] - mean^2 in f32; fine at these scales, consider a
        # compensated combine for very large M.
        n = jnp.float32(M)
        ssum = jnp.sum(stats[:, 0:8, :], axis=(0, 1))
        ssq = jnp.sum(stats[:, 8:16, :], axis=(0, 1))
        mean = ssum / n
        var = jnp.maximum(ssq / n - mean * mean, 0.0)
        scale = g * lax.rsqrt(var + eps)
        shift = b - mean * scale
        sc = jnp.stack([scale, shift])                              # (2, Cp)

        out_flat = pl.pallas_call(
            functools.partial(_norm_act_kernel, act=act),
            out_shape=jax.ShapeDtypeStruct((Mp, Cp), out_dtype),
            grid_spec=pltpu.PrefetchScalarGridSpec(
                num_scalar_prefetch=0,
                grid=(n_split * n_half,),
                in_specs=[
                    pl.BlockSpec((tile_m, Cp), lambda i: (i, 0)),
                    pl.BlockSpec((2, Cp), lambda i: (0, 0)),        # resident
                ],
                out_specs=pl.BlockSpec((tile_m, Cp), lambda i: (i, 0)),
            ),
            compiler_params=pltpu.CompilerParams(
                dimension_semantics=("parallel",),
                vmem_limit_bytes=budget),
        )(y, sc)

    out = out_flat[:M, :Cout].reshape(N, Ho, Wo, Cout).transpose(0, 3, 1, 2)
    return out


# ----------------------------------------------------------------------------
# Pure-JAX reference (same math, no Pallas) for a sanity check
# ----------------------------------------------------------------------------
def _reference(x, weight, gamma, beta, *, kernel_size, stride, dilation, act,
               eps=1e-5, running_mean=None, running_var=None):
    pad = (kernel_size - 1) // 2 if dilation == 1 else dilation
    y = lax.conv_general_dilated(
        x, weight, window_strides=(stride, stride),
        padding=[(pad, pad), (pad, pad)],
        rhs_dilation=(dilation, dilation),
        dimension_numbers=("NCHW", "OIHW", "NCHW"))
    if running_mean is not None:
        mean = running_mean.reshape(1, -1, 1, 1)
        var = running_var.reshape(1, -1, 1, 1)
    else:
        mean = jnp.mean(y, axis=(0, 2, 3), keepdims=True)
        var = jnp.mean((y - mean) ** 2, axis=(0, 2, 3), keepdims=True)
    yn = (y - mean) * lax.rsqrt(var + eps)
    yn = yn * gamma.reshape(1, -1, 1, 1) + beta.reshape(1, -1, 1, 1)
    if act == "relu":
        yn = jnp.maximum(yn, 0.0)
    return yn


if __name__ == "__main__":
    key = jax.random.PRNGKey(0)
    k_x, k_w1, k_w2, k_g, k_b, k_m, k_v = jax.random.split(key, 7)

    N, Cin, H, W = 2, 4, 16, 16
    Cout = 8
    x = jax.random.normal(k_x, (N, Cin, H, W), dtype=jnp.float32)
    gamma = 1.0 + 0.1 * jax.random.normal(k_g, (Cout,), dtype=jnp.float32)
    beta = 0.1 * jax.random.normal(k_b, (Cout,), dtype=jnp.float32)

    # Case 1: training-mode BN, default bf16 MXU operands, 3x3 + ReLU,
    # multi-tile grid exercising the 2-way core split + partial-stats combine.
    w1 = 0.1 * jax.random.normal(k_w1, (Cout, Cin, 3, 3), dtype=jnp.float32)
    out1 = conv_bn_act(x, w1, gamma, beta, kernel_size=3, stride=1,
                       dilation=1, act="relu", tile_m=128)
    out1 = jax.block_until_ready(out1)
    ref1 = _reference(x, w1, gamma, beta, kernel_size=3, stride=1,
                      dilation=1, act="relu")
    assert out1.shape == (N, Cout, H, W)
    err1 = float(jnp.max(jnp.abs(out1 - ref1)))
    assert err1 < 6e-2, f"case 1: mismatch vs reference (max abs err {err1})"

    # Case 2: f32 MXU path, kernel_size=5, dilation=2, no activation
    # (exercises M padding + auto tile selection) with a tight tolerance.
    w2 = 0.1 * jax.random.normal(k_w2, (Cout, Cin, 5, 5), dtype=jnp.float32)
    out2 = conv_bn_act(x, w2, gamma, beta, kernel_size=5, stride=1,
                       dilation=2, act=None, mxu_dtype=jnp.float32)
    out2 = jax.block_until_ready(out2)
    ref2 = _reference(x, w2, gamma, beta, kernel_size=5, stride=1,
                      dilation=2, act=None)
    assert out2.shape == ref2.shape
    err2 = float(jnp.max(jnp.abs(out2 - ref2)))
    assert err2 < 5e-3, f"case 2: mismatch vs reference (max abs err {err2})"

    # Case 3: inference path (running stats folded into one fused pass).
    rm = 0.05 * jax.random.normal(k_m, (Cout,), dtype=jnp.float32)
    rv = jax.random.uniform(k_v, (Cout,), minval=0.5, maxval=1.5,
                            dtype=jnp.float32)
    out3 = conv_bn_act(x, w1, gamma, beta, kernel_size=3, stride=1,
                       dilation=1, act="relu", tile_m=128,
                       running_mean=rm, running_var=rv)
    out3 = jax.block_until_ready(out3)
    ref3 = _reference(x, w1, gamma, beta, kernel_size=3, stride=1,
                      dilation=1, act="relu", running_mean=rm, running_var=rv)
    err3 = float(jnp.max(jnp.abs(out3 - ref3)))
    assert err3 < 6e-2, f"case 3: mismatch vs reference (max abs err {err3})"

    print("KERNEL_OK")
</pallas_src>

<mosaic_0001>
module attributes {stable_mosaic.version = 11 : i64} {
  func.func @_matmul_stats_kernel(%arg0: i32, %arg1: i32, %arg2: memref<128x128xbf16, #tpu.memory_space<vmem>>, %arg3: memref<128x128xbf16, #tpu.memory_space<vmem>>, %arg4: memref<128x128xbf16, #tpu.memory_space<vmem>>, %arg5: memref<1x16x128xf32, #tpu.memory_space<vmem>>, %arg6: memref<16x128xf32, #tpu.memory_space<vmem>>) attributes {dimension_semantics = [#tpu.dimension_semantics<parallel>, #tpu.dimension_semantics<arbitrary>], iteration_bounds = array<i64: 2, 2>, scalar_prefetch = 0 : i64, scratch_operands = 1 : i64, tpu.core_type = #tpu.core_type<tc>, window_params = [{transform_indices = @transform_0, window_bounds = array<i64: 128, 128>}, {pipeline_mode = #tpu.pipeline_mode<synchronous>, transform_indices = @transform_1, window_bounds = array<i64: 128, 128>}, {transform_indices = @transform_2, window_bounds = array<i64: 128, 128>}, {transform_indices = @transform_3, window_bounds = array<i64: 1, 16, 128>}]} {
    %c0_i32 = arith.constant 0 : i32
    %0 = arith.cmpi eq, %arg1, %c0_i32 : i32
    %1 = arith.extui %0 : i1 to i32
    %c0_i32_0 = arith.constant 0 : i32
    %2 = arith.cmpi ne, %1, %c0_i32_0 : i32
    scf.if %2 {
      %cst_16 = arith.constant 0.000000e+00 : f32
      %25 = vector.broadcast %cst_16 : f32 to vector<16x128xf32>
      %c0_17 = arith.constant 0 : index
      %c0_18 = arith.constant 0 : index
      %26 = vector.load %arg6[%c0_17, %c0_18] : memref<16x128xf32, #tpu.memory_space<vmem>>, vector<16x128xf32>
      tpu.vector_store %arg6[%c0_17, %c0_18], %25 {strides = array<i32>} : memref<16x128xf32, #tpu.memory_space<vmem>>, vector<16x128xf32>,
    } else {
    }
    %c0_i32_1 = arith.constant 0 : i32
    %c128_i32 = arith.constant 128 : i32
    %3 = arith.muli %c0_i32_1, %c128_i32 : i32
    %4 = tpu.assume_multiple %3, 128 : i32
    %5 = arith.index_cast %4 : i32 to index
    %c0 = arith.constant 0 : index
    %6 = vector.load %arg2[%5, %c0] : memref<128x128xbf16, #tpu.memory_space<vmem>>, vector<128x128xbf16>
    %c0_2 = arith.constant 0 : index
    %c0_3 = arith.constant 0 : index
    %7 = vector.load %arg3[%c0_2, %c0_3] : memref<128x128xbf16, #tpu.memory_space<vmem>>, vector<128x128xbf16>
    %cst = arith.constant dense<0.000000e+00> : vector<128x128xf32>
    %8 = tpu.matmul %6, %7, %cst {dimension_numbers = #tpu.dot_dimension_numbers<[1], [0], [0], [1], [0, 0, 1, 1], [], []>} : vector<128x128xbf16>, vector<128x128xbf16>, vector<128x128xf32> -> vector<128x128xf32>
    %9 = arith.truncf %8 : vector<128x128xf32> to vector<128x128xbf16>
    %10 = arith.index_cast %4 : i32 to index
    %c0_4 = arith.constant 0 : index
    %11 = vector.load %arg4[%10, %c0_4] : memref<128x128xbf16, #tpu.memory_space<vmem>>, vector<128x128xbf16>
    tpu.vector_store %arg4[%10, %c0_4], %9 {strides = array<i32>} : memref<128x128xbf16, #tpu.memory_space<vmem>>, vector<128x128xbf16>,
    %12 = vector.shape_cast %8 : vector<128x128xf32> to vector<16x8x128xf32>
    %c0_5 = arith.constant 0 : index
    %c0_6 = arith.constant 0 : index
    %13 = vector.load %arg6[%c0_5, %c0_6] : memref<16x128xf32, #tpu.memory_space<vmem>>, vector<8x128xf32>
    %cst_7 = arith.constant dense<0.000000e+00> : vector<8x128xf32>
    %14 = vector.multi_reduction <add>, %12, %cst_7 [0] : vector<16x8x128xf32> to vector<8x128xf32>
    %15 = arith.addf %13, %14 : vector<8x128xf32>
    %c0_8 = arith.constant 0 : index
    %c0_9 = arith.constant 0 : index
    %16 = vector.load %arg6[%c0_8, %c0_9] : memref<16x128xf32, #tpu.memory_space<vmem>>, vector<8x128xf32>
    tpu.vector_store %arg6[%c0_8, %c0_9], %15 {strides = array<i32>} : memref<16x128xf32, #tpu.memory_space<vmem>>, vector<8x128xf32>,
    %c8 = arith.constant 8 : index
    %c0_10 = arith.constant 0 : index
    %17 = vector.load %arg6[%c8, %c0_10] : memref<16x128xf32, #tpu.memory_space<vmem>>, vector<8x128xf32>
    %18 = arith.mulf %12, %12 : vector<16x8x128xf32>
    %cst_11 = arith.constant dense<0.000000e+00> : vector<8x128xf32>
    %19 = vector.multi_reduction <add>, %18, %cst_11 [0] : vector<16x8x128xf32> to vector<8x128xf32>
    %20 = arith.addf %17, %19 : vector<8x128xf32>
    %c8_12 = arith.constant 8 : index
    %c0_13 = arith.constant 0 : index
    %21 = vector.load %arg6[%c8_12, %c0_13] : memref<16x128xf32, #tpu.memory_space<vmem>>, vector<8x128xf32>
    tpu.vector_store %arg6[%c8_12, %c0_13], %20 {strides = array<i32>} : memref<16x128xf32, #tpu.memory_space<vmem>>, vector<8x128xf32>,
    %c1_i32 = arith.constant 1 : i32
    %c1_i32_14 = arith.constant 1 : i32
    %22 = arith.cmpi eq, %arg1, %c1_i32_14 : i32
    %23 = arith.extui %22 : i1 to i32
    %c0_i32_15 = arith.constant 0 : i32
    %24 = arith.cmpi ne, %23, %c0_i32_15 : i32
    scf.if %24 {
      %c0_16 = arith.constant 0 : index
      %c0_17 = arith.constant 0 : index
      %25 = vector.load %arg6[%c0_16, %c0_17] : memref<16x128xf32, #tpu.memory_space<vmem>>, vector<16x128xf32>
      %c0_18 = arith.constant 0 : index
      %c0_19 = arith.constant 0 : index
      %c0_20 = arith.constant 0 : index
      %26 = vector.load %arg5[%c0_18, %c0_19, %c0_20] : memref<1x16x128xf32, #tpu.memory_space<vmem>>, vector<1x16x128xf32>
      %27 = vector.shape_cast %26 : vector<1x16x128xf32> to vector<16x128xf32>
      %28 = vector.shape_cast %25 : vector<16x128xf32> to vector<1x16x128xf32>
      tpu.vector_store %arg5[%c0_18, %c0_19, %c0_20], %28 {strides = array<i32>} : memref<1x16x128xf32, #tpu.memory_space<vmem>>, vector<1x16x128xf32>,
    } else {
    }
    return
  }
  func.func @transform_0(%arg0: i32, %arg1: i32) -> (i32, i32) {
    %c2_i32 = arith.constant 2 : i32
    %0 = arith.muli %arg0, %c2_i32 : i32
    %1 = arith.addi %0, %arg1 : i32
    %c0_i32 = arith.constant 0 : i32
    %c0_i32_0 = arith.constant 0 : i32
    return %1, %c0_i32 : i32, i32
  }
  func.func @transform_1(%arg0: i32, %arg1: i32) -> (i32, i32) {
    %c0_i32 = arith.constant 0 : i32
    %c0_i32_0 = arith.constant 0 : i32
    %c0_i32_1 = arith.constant 0 : i32
    return %c0_i32, %c0_i32_0 : i32, i32
  }
  func.func @transform_2(%arg0: i32, %arg1: i32) -> (i32, i32) {
    %c2_i32 = arith.constant 2 : i32
    %0 = arith.muli %arg0, %c2_i32 : i32
    %1 = arith.addi %0, %arg1 : i32
    %c0_i32 = arith.constant 0 : i32
    %c0_i32_0 = arith.constant 0 : i32
    return %1, %c0_i32 : i32, i32
  }
  func.func @transform_3(%arg0: i32, %arg1: i32) -> (i32, i32, i32) {
    %c0_i32 = arith.constant 0 : i32
    %c0_i32_0 = arith.constant 0 : i32
    %c0_i32_1 = arith.constant 0 : i32
    return %arg0, %c0_i32, %c0_i32_0 : i32, i32, i32
  }
}

</mosaic_0001>

<llo_original>
// kernel: tpu_custom_call.1
$region0: #{tpu_custom_call.1}
  #allocation0 [shape = 'u32[]', space=smem, size = 0x4, offset = 0x4, fixed_abs, tag = 'smem constant byte address 0x4 - core index']
  #allocation1 [shape = 'u32[144,128]{1,0:T(1,128)}', space=vmem, size = 0x12000, scoped, tag = 'internal scratch']
  #allocation2 [shape = 'f32[16,128]{1,0:T(8,128)}', space=vmem, size = 0x2000, scoped, tag = 'scratch operand']
  %s0 = inlined_call_operand.hbm [shape: bf16[512,128], index: 0, kind: input, shape index: {}]
  %s1 = inlined_call_operand.hbm [shape: bf16[128,128], index: 1, kind: input, shape index: {}]
  %s2 = inlined_call_operand.hbm [shape: bf16[512,128], index: 2, kind: output, shape index: {0}]
  %s3 = inlined_call_operand.hbm [shape: f32[2,16,128], index: 3, kind: output, shape index: {1}]
  %4 = xla_tuple %s2, %s3
  %s5 = sld [smem:[#allocation0]]
  $region65: #{tpu_custom_call.1} parent=0
    _
  %s7 = ssub.s32 1, %s5
  %s8 = scalar_select 0, %s7, %s5
  $region1: #{tpu_custom_call.1} parent=0
    #allocation3 [shape = 'u8[65536]{0}', space=vmem, size = 0x10000, scoped, tag = 'input window, operand 0']
    #allocation4 [shape = 's32[2]{0}', space=sflag, size = 0x8, scoped, tag = 'scoped memory for tpu_custom_call.1']
    #allocation5 [shape = 's32[2]{0}', space=sflag, size = 0x8, scoped, tag = 'scoped memory for tpu_custom_call.1']
    #allocation6 [shape = 'u8[32768]{0}', space=vmem, size = 0x8000, scoped, tag = 'input window, operand 1, single buffered']
    #allocation7 [shape = 's32[1]{0}', space=sflag, size = 0x4, scoped, tag = 'scoped memory for tpu_custom_call.1']
    #allocation8 [shape = 'u8[65536]{0}', space=vmem, size = 0x10000, scoped, tag = 'output window, operand 0']
    #allocation9 [shape = 'u8[16384]{0}', space=vmem, size = 0x4000, scoped, tag = 'output window, operand 1']
    #allocation10 [shape = 's32[2]{0}', space=sflag, size = 0x8, scoped, tag = 'scoped memory for tpu_custom_call.1']
    %9 = vsyncpa [#allocation4], 0
    %s10 = scalar_lea.sflag [#allocation4], 1
    %11 = vsyncpa %s10, 0
    %12 = vsyncpa [#allocation7], 0
    %13 = vsyncpa [#allocation5], 0
    %s14 = scalar_lea.sflag [#allocation5], 1
    %15 = vsyncpa %s14, 0
    %16 = vsyncpa [#allocation10], 0
    %s17 = scalar_lea.sflag [#allocation10], 1
    %18 = vsyncpa %s17, 0
    loop: start=0, step=1, limit=6
    $region2: #{tpu_custom_call.1} parent=1 // loop_pre_header
      _
    $region3: #{tpu_custom_call.1} parent=1 // loop_header
      %s20 = sphi 0, %s24
      %p21 = scmp.ge.s32.totalorder %s20, 6
      %s27 = sphi 0, %s39
      %s28 = sphi 0, %s35
      %s29 = sphi 0, %s27
      %s30 = sphi 0, %s28
      %s31 = sphi 0, %s29
      %s32 = sphi 0, %s30
      %s46 = sphi 0, %s48
      %s49 = sphi 0, %s46
      %s50 = sphi 0, %s49
      %s66 = sphi 0, %s50
      %s70 = sphi 0, %s70
      %s72 = sphi 0, %s70
      %s73 = sphi 0, %s72
      %s87 = sphi 0, %s73
      %s97 = sphi 0, %s99
      %s100 = sphi 0, %s97
      %s101 = sphi 0, %s100
      %s117 = sphi 0, %s101
      %s123 = sphi 0, %s125
      %s126 = sphi 0, %s123
      %s127 = sphi 0, %s126
      %s143 = sphi 0, %s127
    $region4: #{tpu_custom_call.1} parent=1 // loop_header_branch
      %23 = sbr.rel (%p21) target = $region8
    $region5: #{tpu_custom_call.1} parent=1 // loop_body
      %s25 = ssub.s32 %s20, 1
      %s26 = ssub.s32 %s20, 2
      %s33 = sadd.s32 1, %s28
      %p34 = scmp.ge.s32.totalorder %s33, 2
      %s35 = scalar_select %p34, 0, %s33
      %s36 = sadd.s32 1, %s27
      %s37 = scalar_select %p34, %s36, %s27
      %p38 = scmp.ge.s32.totalorder %s37, 2
      %s39 = scalar_select %p38, 0, %s37
      %s40 = smul.u32 %s27, 2
      %s41 = sadd.s32 %s40, %s28
      %s42 = smul.u32 %s39, 2
      %s43 = sadd.s32 %s42, %s35
      %s44 = ssub.s32 %s41, %s43
      %p45 = scmp.eq.s32.totalorder %s44, 0
      %s47 = sadd.s32 %s46, 1
      %s48 = scalar_select %p45, %s46, %s47
      %p51 = pneg %p45
      %p52 = scmp.eq.s32.totalorder %s20, 3
      %p53 = por %p51, %p52
      %p54 = scmp.ne.s32.totalorder %s46, %s49
      %p55 = scmp.eq.s32.totalorder %s20, 0
      %p56 = por %p54, %p55
      %p57 = scmp.ne.s32.totalorder %s46, %s49
      %p58 = scmp.eq.s32.totalorder %s25, 3
      %p59 = por %p57, %p58
      %p60 = scmp.ne.s32.totalorder %s49, %s50
      %p61 = scmp.eq.s32.totalorder %s25, 0
      %p62 = por %p60, %p61
      %p63 = scmp.ne.s32.totalorder %s49, %s50
      %p64 = scmp.eq.s32.totalorder %s26, 3
      %p65 = por %p63, %p64
      %p67 = scmp.ne.s32.totalorder %s50, %s66
      %p68 = scmp.eq.s32.totalorder %s26, 0
      %p69 = por %p67, %p68
      %s71 = sadd.s32 %s70, 1
      %p74 = scmp.eq.s32.totalorder %s20, 3
      %p75 = scmp.ne.s32.totalorder %s70, %s72
      %p76 = scmp.eq.s32.totalorder %s20, 0
      %p77 = por %p75, %p76
      %p78 = scmp.ne.s32.totalorder %s70, %s72
      %p79 = scmp.eq.s32.totalorder %s25, 3
      %p80 = por %p78, %p79
      %p81 = scmp.ne.s32.totalorder %s72, %s73
      %p82 = scmp.eq.s32.totalorder %s25, 0
      %p83 = por %p81, %p82
      %p84 = scmp.ne.s32.totalorder %s72, %s73
      %p85 = scmp.eq.s32.totalorder %s26, 3
      %p86 = por %p84, %p85
      %p88 = scmp.ne.s32.totalorder %s73, %s87
      %p89 = scmp.eq.s32.totalorder %s26, 0
      %p90 = por %p88, %p89
      %s91 = smul.u32 %s27, 2
      %s92 = sadd.s32 %s91, %s28
      %s93 = smul.u32 %s39, 2
      %s94 = sadd.s32 %s93, %s35
      %s95 = ssub.s32 %s92, %s94
      %p96 = scmp.eq.s32.totalorder %s95, 0
      %s98 = sadd.s32 %s97, 1
      %s99 = scalar_select %p96, %s97, %s98
      %p102 = pneg %p96
      %p103 = scmp.eq.s32.totalorder %s20, 3
      %p104 = por %p102, %p103
      %p105 = scmp.ne.s32.totalorder %s97, %s100
      %p106 = scmp.eq.s32.totalorder %s20, 0
      %p107 = por %p105, %p106
      %p108 = scmp.ne.s32.totalorder %s97, %s100
      %p109 = scmp.eq.s32.totalorder %s25, 3
      %p110 = por %p108, %p109
      %p111 = scmp.ne.s32.totalorder %s100, %s101
      %p112 = scmp.eq.s32.totalorder %s25, 0
      %p113 = por %p111, %p112
      %p114 = scmp.ne.s32.totalorder %s100, %s101
      %p115 = scmp.eq.s32.totalorder %s26, 3
      %p116 = por %p114, %p115
      %p118 = scmp.ne.s32.totalorder %s101, %s117
      %p119 = scmp.eq.s32.totalorder %s26, 0
      %p120 = por %p118, %p119
      %s121 = ssub.s32 %s27, %s39
      %p122 = scmp.eq.s32.totalorder %s121, 0
      %s124 = sadd.s32 %s123, 1
      %s125 = scalar_select %p122, %s123, %s124
      %p128 = pneg %p122
      %p129 = scmp.eq.s32.totalorder %s20, 3
      %p130 = por %p128, %p129
      %p131 = scmp.ne.s32.totalorder %s123, %s126
      %p132 = scmp.eq.s32.totalorder %s20, 0
      %p133 = por %p131, %p132
      %p134 = scmp.ne.s32.totalorder %s123, %s126
      %p135 = scmp.eq.s32.totalorder %s25, 3
      %p136 = por %p134, %p135
      %p137 = scmp.ne.s32.totalorder %s126, %s127
      %p138 = scmp.eq.s32.totalorder %s25, 0
      %p139 = por %p137, %p138
      %p140 = scmp.ne.s32.totalorder %s126, %s127
      %p141 = scmp.eq.s32.totalorder %s26, 3
      %p142 = por %p140, %p141
      %p144 = scmp.ne.s32.totalorder %s127, %s143
      %p145 = scmp.eq.s32.totalorder %s26, 0
      %p146 = por %p144, %p145
      %p147 = scmp.le.s32.totalorder 1, %s20
      %p148 = scmp.lt.s32.totalorder %s20, 5
      %p149 = pnand %p147, %p148
      %p150 = pneg %p149
      // Predicated region
      $region9: #{tpu_custom_call.1} parent=5 // pred_check
        _
      $region10: #{tpu_custom_call.1} parent=5 // pred_check_branch
        %152 = sbr.rel (%p149) target = $region12
      $region11: #{tpu_custom_call.1} parent=5 // pred_region
        %s153 = ssub.s32 %s20, 1
        // Predicated region
        $region13: #{tpu_custom_call.1} parent=11 // pred_check
          %p154 = pneg %p83
        $region14: #{tpu_custom_call.1} parent=11 // pred_check_branch
          %156 = sbr.rel (%p154) target = $region16
        $region15: #{tpu_custom_call.1} parent=11 // pred_region
          %s158 = ssub.s32 1024, 1024
          %159 = vsyncadd [#allocation7], %s158
          %s160 = sshll.u32 [#allocation6], 4
          %s161 = int_to_ptr.vmem [resolvable:$true] %s160
          %166 = dma.hbm_to_vmem [thread:$0]  %s1, 1024, %s161, [#allocation7], 64, 64, 4
        $region16: #{tpu_custom_call.1} parent=11 // pred_fallthru
          _
      $region12: #{tpu_custom_call.1} parent=5 // pred_fallthru
        _
      %p167 = scmp.lt.s32.totalorder %s20, 4
      // Predicated region
      $region17: #{tpu_custom_call.1} parent=5 // pred_check
        %p168 = pneg %p167
      $region18: #{tpu_custom_call.1} parent=5 // pred_check_branch
        %170 = sbr.rel (%p168) target = $region20
      $region19: #{tpu_custom_call.1} parent=5 // pred_region
        // Predicated region
        $region21: #{tpu_custom_call.1} parent=19 // pred_check
          %p171 = pneg %p56
        $region22: #{tpu_custom_call.1} parent=19 // pred_check_branch
          %173 = sbr.rel (%p171) target = $region24
        $region23: #{tpu_custom_call.1} parent=19 // pred_region
          %s174 = sand.u32 %s46, 1
          %s175 = scalar_lea.sflag [#allocation4], %s174
          %s176 = sand.u32 %s46, 1
          %s177 = smul.addr %s176, 64
          %s178 = scalar_lea.vmem [#allocation3], %s177
          %s179 = smul.u32 %s27, 2
          %s180 = sadd.s32 %s179, %s28
          %s181 = smul.u32 16, %s180
          %s183 = ssub.s32 1024, 1024
          %184 = vsyncadd %s175, %s183
          %s185 = smul.addr %s181, 64
          %s186 = scalar_lea.hbm %s0, %s185
          %s187 = sshll.u32 %s178, 4
          %s188 = int_to_ptr.vmem [resolvable:$true] %s187
          %193 = dma.hbm_to_vmem [thread:$0]  %s186, 1024, %s188, %s175, 64, 64, 4
        $region24: #{tpu_custom_call.1} parent=19 // pred_fallthru
          _
      $region20: #{tpu_custom_call.1} parent=5 // pred_fallthru
        _
      %p194 = scmp.le.s32.totalorder 1, %s20
      %p195 = scmp.lt.s32.totalorder %s20, 5
      %p196 = pnand %p194, %p195
      %p197 = pneg %p196
      // Predicated region
      $region25: #{tpu_custom_call.1} parent=5 // pred_check
        _
      $region26: #{tpu_custom_call.1} parent=5 // pred_check_branch
        %199 = sbr.rel (%p196) target = $region28
      $region27: #{tpu_custom_call.1} parent=5 // pred_region
        %s200 = ssub.s32 %s20, 1
        %s201 = sand.u32 %s49, 1
        %s202 = scalar_lea.sflag [#allocation4], %s201
        %s203 = sand.u32 %s49, 1
        %s204 = smul.addr %s203, 64
        %s205 = scalar_lea.vmem [#allocation3], %s204
        // Predicated region
        $region29: #{tpu_custom_call.1} parent=27 // pred_check
          %p206 = pneg %p62
        $region30: #{tpu_custom_call.1} parent=27 // pred_check_branch
          %208 = sbr.rel (%p206) target = $region32
        $region31: #{tpu_custom_call.1} parent=27 // pred_region
          %209 = dma.done %s202, 1024
        $region32: #{tpu_custom_call.1} parent=27 // pred_fallthru
          _
        // Predicated region
        $region33: #{tpu_custom_call.1} parent=27 // pred_check
          %p210 = pneg %p83
        $region34: #{tpu_custom_call.1} parent=27 // pred_check_branch
          %212 = sbr.rel (%p210) target = $region36
        $region35: #{tpu_custom_call.1} parent=27 // pred_region
          %213 = dma.done [#allocation7], 1024
        $region36: #{tpu_custom_call.1} parent=27 // pred_fallthru
          _
        %s214 = sand.u32 %s49, 1
        %s215 = scalar_lea.sflag [#allocation4], %s214
        %s216 = sand.u32 %s49, 1
        %s217 = smul.addr %s216, 64
        %s218 = scalar_lea.vmem [#allocation3], %s217
        %p219 = pneg %p62
        %p220 = pneg %p59
        %p221 = pneg %p83
        %p222 = pneg %p80
        %p223 = pneg %p113
        %p224 = pneg %p110
        %s225 = sand.u32 %s100, 1
        %s226 = scalar_lea.sflag [#allocation5], %s225
        %s227 = sand.u32 %s100, 1
        %s228 = smul.addr %s227, 64
        %s229 = scalar_lea.vmem [#allocation8], %s228
        %p230 = pneg %p139
        %p231 = pneg %p136
        %s232 = sand.u32 %s126, 1
        %s233 = scalar_lea.sflag [#allocation10], %s232
        %s234 = sand.u32 %s126, 1
        %s235 = smul.addr %s234, 16
        %s236 = scalar_lea.vmem [#allocation9], %s235
        %s237 = smul.u32 %s29, 2
        %s238 = sadd.s32 %s237, %s30
        %s239 = smul.u32 16, %s238
        %s240 = smul.u32 %s29, 2
        %s241 = sadd.s32 %s240, %s30
        %s242 = smul.u32 16, %s241
        %p244 = scmp.eq.s32.totalorder %s30, 0
        // Predicated region
        $region37: #{tpu_custom_call.1} parent=27 // pred_check
          %p245 = pneg %p244
        $region38: #{tpu_custom_call.1} parent=27 // pred_check_branch
          %247 = sbr.rel (%p245) target = $region40
        $region39: #{tpu_custom_call.1} parent=27 // pred_region
          %248 = vst [vmem:[#allocation2] sm:$0xff] 0.0
          %249 = vst [vmem:[#allocation2 + $0x8] sm:$0xff] 0.0
        $region40: #{tpu_custom_call.1} parent=27 // pred_fallthru
          _
        %v250 = vld [vmem:[%s205] sm:$0xf]
        %v251 = vld [vmem:[%s205 + $0x4] sm:$0xf]
        %v252 = vld [vmem:[%s205 + $0x8] sm:$0xf]
        %v253 = vld [vmem:[%s205 + $0xc] sm:$0xf]
        %v254 = vld [vmem:[%s205 + $0x10] sm:$0xf]
        %v255 = vld [vmem:[%s205 + $0x14] sm:$0xf]
        %v256 = vld [vmem:[%s205 + $0x18] sm:$0xf]
        %v257 = vld [vmem:[%s205 + $0x1c] sm:$0xf]
        %v258 = vld [vmem:[%s205 + $0x20] sm:$0xf]
        %v259 = vld [vmem:[%s205 + $0x24] sm:$0xf]
        %v260 = vld [vmem:[%s205 + $0x28] sm:$0xf]
        %v261 = vld [vmem:[%s205 + $0x2c] sm:$0xf]
        %v262 = vld [vmem:[%s205 + $0x30] sm:$0xf]
        %v263 = vld [vmem:[%s205 + $0x34] sm:$0xf]
        %v264 = vld [vmem:[%s205 + $0x38] sm:$0xf]
        %v265 = vld [vmem:[%s205 + $0x3c] sm:$0xf]
        %v266 = vld [vmem:[#allocation6] sm:$0xf]
        %v267 = vld [vmem:[#allocation6 + $0x4] sm:$0xf]
        %v268 = vld [vmem:[#allocation6 + $0x8] sm:$0xf]
        %v269 = vld [vmem:[#allocation6 + $0xc] sm:$0xf]
        %v270 = vld [vmem:[#allocation6 + $0x10] sm:$0xf]
        %v271 = vld [vmem:[#allocation6 + $0x14] sm:$0xf]
        %v272 = vld [vmem:[#allocation6 + $0x18] sm:$0xf]
        %v273 = vld [vmem:[#allocation6 + $0x1c] sm:$0xf]
        %v274 = vld [vmem:[#allocation6 + $0x20] sm:$0xf]
        %v275 = vld [vmem:[#allocation6 + $0x24] sm:$0xf]
        %v276 = vld [vmem:[#allocation6 + $0x28] sm:$0xf]
        %v277 = vld [vmem:[#allocation6 + $0x2c] sm:$0xf]
        %v278 = vld [vmem:[#allocation6 + $0x30] sm:$0xf]
        %v279 = vld [vmem:[#allocation6 + $0x34] sm:$0xf]
        %v280 = vld [vmem:[#allocation6 + $0x38] sm:$0xf]
        %v281 = vld [vmem:[#allocation6 + $0x3c] sm:$0xf]
        %v298 = vunpack.c.l.b16 %v250
        %v299 = vunpack.c.l.b16 %v251
        %v300 = vunpack.c.l.b16 %v252
        %v301 = vunpack.c.l.b16 %v253
        %v302 = vunpack.c.l.b16 %v254
        %v303 = vunpack.c.l.b16 %v255
        %v304 = vunpack.c.l.b16 %v256
        %v305 = vunpack.c.l.b16 %v257
        %v306 = vunpack.c.l.b16 %v258
        %v307 = vunpack.c.l.b16 %v259
        %v308 = vunpack.c.l.b16 %v260
        %v309 = vunpack.c.l.b16 %v261
        %v310 = vunpack.c.l.b16 %v262
        %v311 = vunpack.c.l.b16 %v263
        %v312 = vunpack.c.l.b16 %v264
        %v313 = vunpack.c.l.b16 %v265
        %v314 = vpack.c.b16 %v299, %v298
        %v315 = vpack.c.b16 %v301, %v300
        %v316 = vpack.c.b16 %v303, %v302
        %v317 = vpack.c.b16 %v305, %v304
        %v318 = vpack.c.b16 %v307, %v306
        %v319 = vpack.c.b16 %v309, %v308
        %v320 = vpack.c.b16 %v311, %v310
        %v321 = vpack.c.b16 %v313, %v312
        %v346 = vunpack.c.l.b16 %v266
        %v347 = vunpack.c.l.b16 %v267
        %v348 = vunpack.c.l.b16 %v268
        %v349 = vunpack.c.l.b16 %v269
        %v350 = vunpack.c.l.b16 %v270
        %v351 = vunpack.c.l.b16 %v271
        %v352 = vunpack.c.l.b16 %v272
        %v353 = vunpack.c.l.b16 %v273
        %v354 = vunpack.c.l.b16 %v274
        %v355 = vunpack.c.l.b16 %v275
        %v356 = vunpack.c.l.b16 %v276
        %v357 = vunpack.c.l.b16 %v277
        %v358 = vunpack.c.l.b16 %v278
        %v359 = vunpack.c.l.b16 %v279
        %v360 = vunpack.c.l.b16 %v280
        %v361 = vunpack.c.l.b16 %v281
        %v362 = vpack.c.b16 %v347, %v346
        %v363 = vpack.c.b16 %v349, %v348
        %v364 = vpack.c.b16 %v351, %v350
        %v365 = vpack.c.b16 %v353, %v352
        %v366 = vpack.c.b16 %v355, %v354
        %v367 = vpack.c.b16 %v357, %v356
        %v368 = vpack.c.b16 %v359, %v358
        %v369 = vpack.c.b16 %v361, %v360
        %378 = vmatprep.subr.bf16.mxu0 0
        %379 = vmatpush1.bf16.msra.mxu0 %v362
        %380 = vmatprep.subr.bf16.mxu0 0
        %381 = vmatpush1.bf16.msra.mxu0 %v363
        %382 = vmatprep.subr.bf16.mxu0 0
        %383 = vmatpush1.bf16.msra.mxu0 %v364
        %384 = vmatprep.subr.bf16.mxu0 0
        %385 = vmatpush1.bf16.msra.mxu0 %v365
        %386 = vmatprep.subr.bf16.mxu0 0
        %387 = vmatpush1.bf16.msra.mxu0 %v366
        %388 = vmatprep.subr.bf16.mxu0 0
        %389 = vmatpush1.bf16.msra.mxu0 %v367
        %390 = vmatprep.subr.bf16.mxu0 0
        %391 = vmatpush1.bf16.msra.mxu0 %v368
        %392 = vmatprep.subr.bf16.mxu0 0
        %393 = vmatpush1.bf16.msra.mxu0 %v369
        %394 = vmatprep.subr.bf16.mxu0 0
        %395 = vmatpush1.bf16.msra.mxu0 0
        %396 = vmatprep.subr.bf16.mxu0 0
        %397 = vmatpush1.bf16.msra.mxu0 0
        %398 = vmatprep.subr.bf16.mxu0 0
        %399 = vmatpush1.bf16.msra.mxu0 0
        %400 = vmatprep.subr.bf16.mxu0 0
        %401 = vmatpush1.bf16.msra.mxu0 0
        %402 = vmatprep.subr.bf16.mxu0 0
        %403 = vmatpush1.bf16.msra.mxu0 0
        %404 = vmatprep.subr.bf16.mxu0 0
        %405 = vmatpush1.bf16.msra.mxu0 0
        %406 = vmatprep.subr.bf16.mxu0 0
        %407 = vmatpush1.bf16.msra.mxu0 0
        %408 = vmatprep.subr.bf16.mxu0 0
        %409 = vmatpush1.bf16.msra.mxu0 0
        %410 = vmatprep.mubr.bf16.mxu0 0
        %411 = vmatmul.mubr.bf16.gmra.mrb[0].mxu0 %v314
        %v412 = vpop.f32.mrb[0].mxu0
        %v413 = vadd.f32 0.0, %v412
        %v414 = vpop.f32.mrb[0].mxu0
        %v415 = vpop.f32.mrb[0].mxu0
        %v416 = vadd.f32 0.0, %v415
        %v417 = vpop.f32.mrb[0].mxu0
        %418 = vmatprep.mubr.bf16.mxu0 0
        %419 = vmatmul.mubr.bf16.gmra.mrb[0].mxu0 %v315
        %v420 = vpop.f32.mrb[0].mxu0
        %v421 = vadd.f32 0.0, %v420
        %v422 = vpop.f32.mrb[0].mxu0
        %v423 = vpop.f32.mrb[0].mxu0
        %v424 = vadd.f32 0.0, %v423
        %v425 = vpop.f32.mrb[0].mxu0
        %426 = vmatprep.mubr.bf16.mxu0 0
        %427 = vmatmul.mubr.bf16.gmra.mrb[0].mxu0 %v316
        %v428 = vpop.f32.mrb[0].mxu0
        %v429 = vadd.f32 0.0, %v428
        %v430 = vpop.f32.mrb[0].mxu0
        %v431 = vpop.f32.mrb[0].mxu0
        %v432 = vadd.f32 0.0, %v431
        %v433 = vpop.f32.mrb[0].mxu0
        %434 = vmatprep.mubr.bf16.mxu0 0
        %435 = vmatmul.mubr.bf16.gmra.mrb[0].mxu0 %v317
        %v436 = vpop.f32.mrb[0].mxu0
        %v437 = vadd.f32 0.0, %v436
        %v438 = vpop.f32.mrb[0].mxu0
        %v439 = vpop.f32.mrb[0].mxu0
        %v440 = vadd.f32 0.0, %v439
        %v441 = vpop.f32.mrb[0].mxu0
        %442 = vmatprep.mubr.bf16.mxu0 0
        %443 = vmatmul.mubr.bf16.gmra.mrb[0].mxu0 %v318
        %v444 = vpop.f32.mrb[0].mxu0
        %v445 = vadd.f32 0.0, %v444
        %v446 = vpop.f32.mrb[0].mxu0
        %v447 = vpop.f32.mrb[0].mxu0
        %v448 = vadd.f32 0.0, %v447
        %v449 = vpop.f32.mrb[0].mxu0
        %450 = vmatprep.mubr.bf16.mxu0 0
        %451 = vmatmul.mubr.bf16.gmra.mrb[0].mxu0 %v319
        %v452 = vpop.f32.mrb[0].mxu0
        %v453 = vadd.f32 0.0, %v452
        %v454 = vpop.f32.mrb[0].mxu0
        %v455 = vpop.f32.mrb[0].mxu0
        %v456 = vadd.f32 0.0, %v455
        %v457 = vpop.f32.mrb[0].mxu0
        %458 = vmatprep.mubr.bf16.mxu0 0
        %459 = vmatmul.mubr.bf16.gmra.mrb[0].mxu0 %v320
        %v460 = vpop.f32.mrb[0].mxu0
        %v461 = vadd.f32 0.0, %v460
        %v462 = vpop.f32.mrb[0].mxu0
        %v463 = vpop.f32.mrb[0].mxu0
        %v464 = vadd.f32 0.0, %v463
        %v465 = vpop.f32.mrb[0].mxu0
        %466 = vmatprep.mubr.bf16.mxu0 0
        %467 = vmatmul.mubr.bf16.gmra.mrb[0].mxu0 %v321
        %v468 = vpop.f32.mrb[0].mxu0
        %v469 = vadd.f32 0.0, %v468
        %v470 = vpop.f32.mrb[0].mxu0
        %v471 = vpop.f32.mrb[0].mxu0
        %v472 = vadd.f32 0.0, %v471
        %v473 = vpop.f32.mrb[0].mxu0
        %474 = vdwg.mxu0
        %v475 = vpack.c.bf16 %v416, %v413
        %v476 = vpack.c.bf16 %v424, %v421
        %v477 = vpack.c.bf16 %v432, %v429
        %v478 = vpack.c.bf16 %v440, %v437
        %v479 = vpack.c.bf16 %v448, %v445
        %v480 = vpack.c.bf16 %v456, %v453
        %v481 = vpack.c.bf16 %v464, %v461
        %v482 = vpack.c.bf16 %v472, %v469
        %v491 = vunpack.c.l.b16 %v475
        %v492 = vunpack.c.h.b16 %v475
        %v493 = vunpack.c.l.b16 %v476
        %v494 = vunpack.c.h.b16 %v476
        %v495 = vunpack.c.l.b16 %v477
        %v496 = vunpack.c.h.b16 %v477
        %v497 = vunpack.c.l.b16 %v478
        %v498 = vunpack.c.h.b16 %v478
        %v499 = vunpack.c.l.b16 %v479
        %v500 = vunpack.c.h.b16 %v479
        %v501 = vunpack.c.l.b16 %v480
        %v502 = vunpack.c.h.b16 %v480
        %v503 = vunpack.c.l.b16 %v481
        %v504 = vunpack.c.h.b16 %v481
        %v505 = vunpack.c.l.b16 %v482
        %v506 = vunpack.c.h.b16 %v482
        %v507 = vpack.c.b16 %v491, %v491
        %v508 = vpack.c.b16 %v492, %v492
        %v509 = vpack.c.b16 %v493, %v493
        %v510 = vpack.c.b16 %v494, %v494
        %v511 = vpack.c.b16 %v495, %v495
        %v512 = vpack.c.b16 %v496, %v496
        %v513 = vpack.c.b16 %v497, %v497
        %v514 = vpack.c.b16 %v498, %v498
        %v515 = vpack.c.b16 %v499, %v499
        %v516 = vpack.c.b16 %v500, %v500
        %v517 = vpack.c.b16 %v501, %v501
        %v518 = vpack.c.b16 %v502, %v502
        %v519 = vpack.c.b16 %v503, %v503
        %v520 = vpack.c.b16 %v504, %v504
        %v521 = vpack.c.b16 %v505, %v505
        %v522 = vpack.c.b16 %v506, %v506
        %539 = vst [vmem:[%s229] sm:$0xf] %v507
        %540 = vst [vmem:[%s229 + $0x4] sm:$0xf] %v508
        %541 = vst [vmem:[%s229 + $0x8] sm:$0xf] %v509
        %542 = vst [vmem:[%s229 + $0xc] sm:$0xf] %v510
        %543 = vst [vmem:[%s229 + $0x10] sm:$0xf] %v511
        %544 = vst [vmem:[%s229 + $0x14] sm:$0xf] %v512
        %545 = vst [vmem:[%s229 + $0x18] sm:$0xf] %v513
        %546 = vst [vmem:[%s229 + $0x1c] sm:$0xf] %v514
        %547 = vst [vmem:[%s229 + $0x20] sm:$0xf] %v515
        %548 = vst [vmem:[%s229 + $0x24] sm:$0xf] %v516
        %549 = vst [vmem:[%s229 + $0x28] sm:$0xf] %v517
        %550 = vst [vmem:[%s229 + $0x2c] sm:$0xf] %v518
        %551 = vst [vmem:[%s229 + $0x30] sm:$0xf] %v519
        %552 = vst [vmem:[%s229 + $0x34] sm:$0xf] %v520
        %553 = vst [vmem:[%s229 + $0x38] sm:$0xf] %v521
        %554 = vst [vmem:[%s229 + $0x3c] sm:$0xf] %v522
        %v555 = vld [vmem:[#allocation2] sm:$0xff]
        %v556 = vadd.f32 %v413, %v416
        %v557 = vadd.f32 %v556, %v421
        %v558 = vadd.f32 %v557, %v424
        %v559 = vadd.f32 %v558, %v429
        %v560 = vadd.f32 %v559, %v432
        %v561 = vadd.f32 %v560, %v437
        %v562 = vadd.f32 %v561, %v440
        %v563 = vadd.f32 %v562, %v445
        %v564 = vadd.f32 %v563, %v448
        %v565 = vadd.f32 %v564, %v453
        %v566 = vadd.f32 %v565, %v456
        %v567 = vadd.f32 %v566, %v461
        %v568 = vadd.f32 %v567, %v464
        %v569 = vadd.f32 %v568, %v469
        %v570 = vadd.f32 %v569, %v472
        %v571 = vadd.f32 %v555, %v570
        %572 = vst [vmem:[#allocation2] sm:$0xff] %v571
        %v573 = vld [vmem:[#allocation2 + $0x8] sm:$0xff]
        %v574 = vmul.f32 %v413, %v413
        %v575 = vmul.f32 %v416, %v416
        %v576 = vmul.f32 %v421, %v421
        %v577 = vmul.f32 %v424, %v424
        %v578 = vmul.f32 %v429, %v429
        %v579 = vmul.f32 %v432, %v432
        %v580 = vmul.f32 %v437, %v437
        %v581 = vmul.f32 %v440, %v440
        %v582 = vmul.f32 %v445, %v445
        %v583 = vmul.f32 %v448, %v448
        %v584 = vmul.f32 %v453, %v453
        %v585 = vmul.f32 %v456, %v456
        %v586 = vmul.f32 %v461, %v461
        %v587 = vmul.f32 %v464, %v464
        %v588 = vmul.f32 %v469, %v469
        %v589 = vmul.f32 %v472, %v472
        %v590 = vadd.f32 %v574, %v575
        %v591 = vadd.f32 %v590, %v576
        %v592 = vadd.f32 %v591, %v577
        %v593 = vadd.f32 %v592, %v578
        %v594 = vadd.f32 %v593, %v579
        %v595 = vadd.f32 %v594, %v580
        %v596 = vadd.f32 %v595, %v581
        %v597 = vadd.f32 %v596, %v582
        %v598 = vadd.f32 %v597, %v583
        %v599 = vadd.f32 %v598, %v584
        %v600 = vadd.f32 %v599, %v585
        %v601 = vadd.f32 %v600, %v586
        %v602 = vadd.f32 %v601, %v587
        %v603 = vadd.f32 %v602, %v588
        %v604 = vadd.f32 %v603, %v589
        %v605 = vadd.f32 %v573, %v604
        %606 = vst [vmem:[#allocation2 + $0x8] sm:$0xff] %v605
        %p607 = scmp.eq.s32.totalorder %s30, 1
        // Predicated region
        $region41: #{tpu_custom_call.1} parent=27 // pred_check
          %p608 = pneg %p607
        $region42: #{tpu_custom_call.1} parent=27 // pred_check_branch
          %610 = sbr.rel (%p608) target = $region44
        $region43: #{tpu_custom_call.1} parent=27 // pred_region
          %v611 = vld [vmem:[#allocation2] sm:$0xff]
          %v612 = vld [vmem:[#allocation2 + $0x8] sm:$0xff]
          %613 = vst [vmem:[%s236] sm:$0xff] %v611
          %614 = vst [vmem:[%s236 + $0x8] sm:$0xff] %v612
        $region44: #{tpu_custom_call.1} parent=27 // pred_fallthru
          _
        %s615 = sand.u32 %s100, 1
        %s616 = scalar_lea.sflag [#allocation5], %s615
        %s617 = sand.u32 %s100, 1
        %s618 = smul.addr %s617, 64
        %s619 = scalar_lea.vmem [#allocation8], %s618
        %s620 = sand.u32 %s126, 1
        %s621 = scalar_lea.sflag [#allocation10], %s620
        %s622 = sand.u32 %s126, 1
        %s623 = smul.addr %s622, 16
        %s624 = scalar_lea.vmem [#allocation9], %s623
        // Predicated region
        $region45: #{tpu_custom_call.1} parent=27 // pred_check
          %p625 = pneg %p110
        $region46: #{tpu_custom_call.1} parent=27 // pred_check_branch
          %627 = sbr.rel (%p625) target = $region48
        $region47: #{tpu_custom_call.1} parent=27 // pred_region
          %s628 = smul.u32 %s29, 2
          %s629 = sadd.s32 %s628, %s30
          %s630 = smul.u32 16, %s629
          %s632 = ssub.s32 1024, 1024
          %633 = vsyncadd %s616, %s632
          %s634 = smul.addr %s630, 64
          %s635 = scalar_lea.hbm %s2, %s634
          %s636 = sshll.u32 %s619, 4
          %s637 = int_to_ptr.vmem [resolvable:$true] %s636
          %642 = dma.vmem_to_hbm [thread:$0]  %s637, 1024, %s635, %s616, 64, 64, 4
        $region48: #{tpu_custom_call.1} parent=27 // pred_fallthru
          _
        // Predicated region
        $region49: #{tpu_custom_call.1} parent=27 // pred_check
          %p643 = pneg %p136
        $region50: #{tpu_custom_call.1} parent=27 // pred_check_branch
          %645 = sbr.rel (%p643) target = $region52
        $region51: #{tpu_custom_call.1} parent=27 // pred_region
          %s647 = ssub.s32 256, 256
          %648 = vsyncadd %s621, %s647
          %s649 = smul.addr %s29, 2
          %s650 = smul.addr %s649, 128
          %s651 = scalar_lea.hbm %s3, %s650
          %s652 = sshll.u32 %s624, 4
          %s653 = int_to_ptr.vmem [resolvable:$true] %s652
          %658 = dma.vmem_to_hbm [thread:$0]  %s653, 256, %s651, %s621, 128, 128, 8
        $region52: #{tpu_custom_call.1} parent=27 // pred_fallthru
          _
      $region28: #{tpu_custom_call.1} parent=5 // pred_fallthru
        _
      %p659 = scmp.le.s32.totalorder 2, %s20
      // Predicated region
      $region53: #{tpu_custom_call.1} parent=5 // pred_check
        %p660 = pneg %p659
      $region54: #{tpu_custom_call.1} parent=5 // pred_check_branch
        %662 = sbr.rel (%p660) target = $region56
      $region55: #{tpu_custom_call.1} parent=5 // pred_region
        %s663 = ssub.s32 %s20, 2
        // Predicated region
        $region57: #{tpu_custom_call.1} parent=55 // pred_check
          %p664 = pneg %p116
        $region58: #{tpu_custom_call.1} parent=55 // pred_check_branch
          %666 = sbr.rel (%p664) target = $region60
        $region59: #{tpu_custom_call.1} parent=55 // pred_region
          %s667 = sand.u32 %s101, 1
          %s668 = scalar_lea.sflag [#allocation5], %s667
          %s669 = sand.u32 %s101, 1
          %s670 = smul.addr %s669, 64
          %s671 = scalar_lea.vmem [#allocation8], %s670
          %672 = dma.done %s668, 1024
        $region60: #{tpu_custom_call.1} parent=55 // pred_fallthru
          _
        // Predicated region
        $region61: #{tpu_custom_call.1} parent=55 // pred_check
          %p673 = pneg %p142
        $region62: #{tpu_custom_call.1} parent=55 // pred_check_branch
          %675 = sbr.rel (%p673) target = $region64
        $region63: #{tpu_custom_call.1} parent=55 // pred_region
          %s676 = sand.u32 %s127, 1
          %s677 = scalar_lea.sflag [#allocation10], %s676
          %s678 = sand.u32 %s127, 1
          %s679 = smul.addr %s678, 16
          %s680 = scalar_lea.vmem [#allocation9], %s679
          %681 = dma.done %s677, 256
        $region64: #{tpu_custom_call.1} parent=55 // pred_fallthru
          _
      $region56: #{tpu_custom_call.1} parent=5 // pred_fallthru
        _
    $region6: #{tpu_custom_call.1} parent=1 // loop_footer
      %s24 = sadd.s32 1, %s20
    $region7: #{tpu_custom_call.1} parent=1 // loop_footer_branch
      %19 = sbr.rel target = $region3
    $region8: #{tpu_custom_call.1} parent=1 // loop_exit
      _
    %682 = vsyncpa [#allocation4], 1
    %s683 = scalar_lea.sflag [#allocation4], 1
    %684 = vsyncpa %s683, 1
    %685 = vsyncpa [#allocation7], 1
    %686 = vsyncpa [#allocation5], 1
    %s687 = scalar_lea.sflag [#allocation5], 1
    %688 = vsyncpa %s687, 1
    %689 = vsyncpa [#allocation10], 1
    %s690 = scalar_lea.sflag [#allocation10], 1
    %691 = vsyncpa %s690, 1

</llo_original>
